<compile_context>
chip_gen: v7x
topology: tpu7x:2x2x1
jax: 0.10.0
libtpu: 0.0.40
codegen_flags: <defaults>
</compile_context>

<pallas_src>
import jax
import jax.numpy as jnp
from jax.experimental import pallas as pl
from jax.experimental.pallas import tpu as pltpu


def _mlp_proj_kernel(x_ref, wt_ref, b_ref, o_ref):
    """One (batch, spatial-tile) grid step.

    x_ref:  (C, tn)   activation tile, native NCHW layout (channels on sublanes)
    wt_ref: (C, E)    pre-transposed nn.Linear weight (lane-dense along E)
    b_ref:  (1, E)    bias, float32
    o_ref:  (tn, E)   output tile, (spatial, embed) row-major
    """
    # MXU matmul with transposed LHS: contract C (dim 0 of both operands),
    # producing (tn, E) directly -- no accumulator transpose, f32 accumulation.
    acc = jax.lax.dot_general(
        x_ref[...], wt_ref[...],
        dimension_numbers=(((0,), (0,)), ((), ())),
        preferred_element_type=jnp.float32,
    )                                           # (tn, E) float32
    o_ref[...] = (acc + b_ref[...]).astype(o_ref.dtype)


# Conservative budgets that fit every generation (v7x has 64 MiB VMEM per TC).
_VMEM_TILE_BUDGET = 40 << 20     # bytes allowed for the pipelined tile buffers
_VMEM_LIMIT_BYTES = 56 << 20     # scoped-VMEM limit handed to the compiler


def _pick_hw_tile(hw, *, bytes_per_row, resident_bytes, min_steps=1):
    """Largest spatial tile (multiple of 128, divides HW) within the VMEM budget."""
    candidates = [t for t in (4096, 2048, 1024, 512, 256, 128) if hw % t == 0]
    for t in candidates:
        if hw // t < min_steps:
            continue  # keep >= min_steps grid steps (v7x dual-TC utilization)
        if resident_bytes + 2 * t * bytes_per_row <= _VMEM_TILE_BUDGET:
            return t
    if candidates:
        return candidates[-1]
    return hw  # full spatial extent: always a legal block size


def mlp_forward(x, weight, bias, *, hw_tile=None, out_dtype=None):
    """Pallas equivalent of MLP.forward: (B, C, H, W) -> (B, H*W, E)."""
    B, C, H, W = x.shape
    E, C_w = weight.shape
    assert C_w == C, "weight must be (embed_dim, input_dim)"
    HW = H * W
    if out_dtype is None:
        out_dtype = x.dtype

    # Metadata-only reshape: NCHW row-major already stores x as (B, C, HW).
    x3 = x.reshape(B, C, HW)

    # One-time tiny reshuffles of the parameters: transpose weight to (C, E)
    # so the kernel matmul emits (tn, E) directly and E sits on lanes.
    wt = weight.T                                       # (C, E)
    b2 = bias.reshape(1, E).astype(jnp.float32)

    # Pad E up to a lane multiple so output stores are full-width (no vst.msk).
    E_pad = ((E + 127) // 128) * 128
    if E_pad != E:
        wt = jnp.pad(wt, ((0, 0), (0, E_pad - E)))
        b2 = jnp.pad(b2, ((0, 0), (0, E_pad - E)))

    in_item = x3.dtype.itemsize
    out_item = jnp.dtype(out_dtype).itemsize
    w_item = wt.dtype.itemsize
    resident_bytes = 2 * (C * E_pad * w_item + E_pad * 4)     # weight + bias buffers
    bytes_per_row = C * in_item + E_pad * out_item            # per spatial row (in + out)

    if hw_tile is None:
        hw_tile = _pick_hw_tile(
            HW,
            bytes_per_row=bytes_per_row,
            resident_bytes=resident_bytes,
            # When B == 1 force >= 2 spatial steps so both v7x TCs get work.
            min_steps=2 if B == 1 else 1,
        )
    assert HW % hw_tile == 0, "spatial extent must be divisible by hw_tile"

    grid = (B, HW // hw_tile)

    flops = 2 * B * HW * C * E
    bytes_accessed = (x3.size * in_item + wt.size * w_item + b2.size * 4
                      + B * HW * E_pad * out_item)

    out = pl.pallas_call(
        _mlp_proj_kernel,
        out_shape=jax.ShapeDtypeStruct((B, HW, E_pad), out_dtype),
        grid_spec=pltpu.PrefetchScalarGridSpec(
            num_scalar_prefetch=0,
            grid=grid,
            in_specs=[
                # Activations: native layout, tiled over spatial positions.
                pl.BlockSpec((None, C, hw_tile), lambda b, i: (b, 0, i)),
                # Weight & bias: constant index map -> stay resident in VMEM.
                pl.BlockSpec((C, E_pad), lambda b, i: (0, 0)),
                pl.BlockSpec((1, E_pad), lambda b, i: (0, 0)),
            ],
            out_specs=pl.BlockSpec((None, hw_tile, E_pad), lambda b, i: (b, i, 0)),
        ),
        compiler_params=pltpu.CompilerParams(
            dimension_semantics=("parallel", "parallel"),
            vmem_limit_bytes=_VMEM_LIMIT_BYTES,
        ),
        cost_estimate=pl.CostEstimate(
            flops=flops,
            transcendentals=0,
            bytes_accessed=bytes_accessed,
        ),
    )(x3, wt, b2)

    if E_pad != E:
        out = out[..., :E]
    return out


if __name__ == "__main__":
    # Small shapes consistent with the module: input_dim=C=32, embed_dim=E=128.
    B, C, H, W = 2, 32, 16, 16
    E = 128  # multiple of 128 -> lane-dense output stores, no padding path

    key = jax.random.PRNGKey(0)
    kx, kw, kb = jax.random.split(key, 3)

    x = jax.random.normal(kx, (B, C, H, W), dtype=jnp.float32)
    # Deterministic nn.Linear-style init (uniform in +-1/sqrt(C)).
    bound = 1.0 / jnp.sqrt(jnp.float32(C))
    weight = jax.random.uniform(kw, (E, C), dtype=jnp.float32,
                                minval=-bound, maxval=bound)
    bias = jax.random.uniform(kb, (E,), dtype=jnp.float32,
                              minval=-bound, maxval=bound)

    fwd = jax.jit(mlp_forward, static_argnames=("hw_tile", "out_dtype"))

    # Plain-JAX reference in full f32 precision.
    ref = jnp.einsum(
        "bcn,ec->bne", x.reshape(B, C, H * W), weight,
        precision=jax.lax.Precision.HIGHEST,
    ) + bias

    out = jax.block_until_ready(fwd(x, weight, bias))
    assert out.shape == (B, H * W, E)
    assert jnp.allclose(out, ref, atol=1e-4, rtol=1e-4)

    print("KERNEL_OK")
</pallas_src>

<mosaic_0001>
module attributes {stable_mosaic.version = 11 : i64} {
  func.func @_mlp_proj_kernel(%arg0: i32, %arg1: i32, %arg2: memref<1x32x256xf32, #tpu.memory_space<vmem>>, %arg3: memref<32x128xf32, #tpu.memory_space<vmem>>, %arg4: memref<1x128xf32, #tpu.memory_space<vmem>>, %arg5: memref<1x256x128xf32, #tpu.memory_space<vmem>>) attributes {dimension_semantics = [#tpu.dimension_semantics<parallel>, #tpu.dimension_semantics<parallel>], iteration_bounds = array<i64: 2, 1>, scalar_prefetch = 0 : i64, scratch_operands = 0 : i64, tpu.core_type = #tpu.core_type<tc>, window_params = [{transform_indices = @transform_0, window_bounds = array<i64: 1, 32, 256>}, {pipeline_mode = #tpu.pipeline_mode<synchronous>, transform_indices = @transform_1, window_bounds = array<i64: 32, 128>}, {pipeline_mode = #tpu.pipeline_mode<synchronous>, transform_indices = @transform_2, window_bounds = array<i64: 1, 128>}, {transform_indices = @transform_3, window_bounds = array<i64: 1, 256, 128>}]} {
    %c0 = arith.constant 0 : index
    %c0_0 = arith.constant 0 : index
    %c0_1 = arith.constant 0 : index
    %0 = vector.load %arg2[%c0, %c0_0, %c0_1] : memref<1x32x256xf32, #tpu.memory_space<vmem>>, vector<1x32x256xf32>
    %1 = vector.shape_cast %0 : vector<1x32x256xf32> to vector<32x256xf32>
    %c0_2 = arith.constant 0 : index
    %c0_3 = arith.constant 0 : index
    %2 = vector.load %arg3[%c0_2, %c0_3] : memref<32x128xf32, #tpu.memory_space<vmem>>, vector<32x128xf32>
    %cst = arith.constant dense<0.000000e+00> : vector<256x128xf32>
    %3 = tpu.matmul %1, %2, %cst {dimension_numbers = #tpu.dot_dimension_numbers<[0], [0], [1], [1], [0, 1, 1, 1], [], []>} : vector<32x256xf32>, vector<32x128xf32>, vector<256x128xf32> -> vector<256x128xf32>
    %c0_4 = arith.constant 0 : index
    %c0_5 = arith.constant 0 : index
    %4 = vector.load %arg4[%c0_4, %c0_5] : memref<1x128xf32, #tpu.memory_space<vmem>>, vector<1x128xf32>
    %5 = vector.broadcast %4 : vector<1x128xf32> to vector<256x128xf32>
    %6 = arith.addf %3, %5 : vector<256x128xf32>
    %c0_6 = arith.constant 0 : index
    %c0_7 = arith.constant 0 : index
    %c0_8 = arith.constant 0 : index
    %7 = vector.load %arg5[%c0_6, %c0_7, %c0_8] : memref<1x256x128xf32, #tpu.memory_space<vmem>>, vector<1x256x128xf32>
    %8 = vector.shape_cast %7 : vector<1x256x128xf32> to vector<256x128xf32>
    %9 = vector.shape_cast %6 : vector<256x128xf32> to vector<1x256x128xf32>
    tpu.vector_store %arg5[%c0_6, %c0_7, %c0_8], %9 {strides = array<i32>} : memref<1x256x128xf32, #tpu.memory_space<vmem>>, vector<1x256x128xf32>,
    return
  }
  func.func @transform_0(%arg0: i32, %arg1: i32) -> (i32, i32, i32) {
    %c0_i32 = arith.constant 0 : i32
    %c0_i32_0 = arith.constant 0 : i32
    return %arg0, %c0_i32, %arg1 : i32, i32, i32
  }
  func.func @transform_1(%arg0: i32, %arg1: i32) -> (i32, i32) {
    %c0_i32 = arith.constant 0 : i32
    %c0_i32_0 = arith.constant 0 : i32
    %c0_i32_1 = arith.constant 0 : i32
    return %c0_i32, %c0_i32_0 : i32, i32
  }
  func.func @transform_2(%arg0: i32, %arg1: i32) -> (i32, i32) {
    %c0_i32 = arith.constant 0 : i32
    %c0_i32_0 = arith.constant 0 : i32
    %c0_i32_1 = arith.constant 0 : i32
    return %c0_i32, %c0_i32_0 : i32, i32
  }
  func.func @transform_3(%arg0: i32, %arg1: i32) -> (i32, i32, i32) {
    %c0_i32 = arith.constant 0 : i32
    %c0_i32_0 = arith.constant 0 : i32
    return %arg0, %arg1, %c0_i32 : i32, i32, i32
  }
}

</mosaic_0001>

<llo_original>
// kernel: mlp_forward.1
$region0: #{mlp_forward.1}
  #allocation0 [shape = 'u32[]', space=smem, size = 0x4, offset = 0x4, fixed_abs, tag = 'smem constant byte address 0x4 - core index']
  #allocation1 [shape = 'u32[144,128]{1,0:T(1,128)}', space=vmem, size = 0x12000, scoped, tag = 'internal scratch']
  %s0 = inlined_call_operand.vmem [shape: f32[2,32,256], index: 0, kind: input, shape index: {}]
  %s1 = inlined_call_operand.vmem [shape: f32[32,128], index: 1, kind: input, shape index: {}]
  %s2 = inlined_call_operand.vmem [shape: f32[1,128], index: 2, kind: input, shape index: {}]
  %s3 = inlined_call_operand.hbm [shape: f32[2,256,128], index: 3, kind: output, shape index: {}]
  %s4 = sld [smem:[#allocation0]]
  $region45: #{mlp_forward.1} parent=0
    _
  %s6 = ssub.s32 1, %s4
  %s7 = scalar_select 0, %s6, %s4
  $region1: #{mlp_forward.1} parent=0
    #allocation2 [shape = 'u8[262144]{0}', space=vmem, size = 0x40000, scoped, tag = 'output window, operand 0']
    #allocation3 [shape = 's32[2]{0}', space=sflag, size = 0x8, scoped, tag = 'scoped memory for mlp_forward.1']
    %8 = vsyncpa [#allocation3], 0
    %s9 = scalar_lea.sflag [#allocation3], 1
    %10 = vsyncpa %s9, 0
    loop: start=0, step=1, limit=4
    $region2: #{mlp_forward.1} parent=1 // loop_pre_header
      _
    $region3: #{mlp_forward.1} parent=1 // loop_header
      %s12 = sphi 0, %s16
      %p13 = scmp.ge.s32.totalorder %s12, 4
      %s19 = sphi 0, %s31
      %s20 = sphi 0, %s27
      %s21 = sphi 0, %s19
      %s22 = sphi 0, %s20
      %s23 = sphi 0, %s21
      %s24 = sphi 0, %s22
      %s36 = sphi 0, %s38
      %s39 = sphi 0, %s36
      %s40 = sphi 0, %s39
      %s56 = sphi 0, %s40
      %s60 = sphi 0, %s60
      %s62 = sphi 0, %s60
      %s63 = sphi 0, %s62
      %s77 = sphi 0, %s63
      %s81 = sphi 0, %s81
      %s83 = sphi 0, %s81
      %s84 = sphi 0, %s83
      %s98 = sphi 0, %s84
      %s106 = sphi 0, %s108
      %s109 = sphi 0, %s106
      %s110 = sphi 0, %s109
      %s126 = sphi 0, %s110
    $region4: #{mlp_forward.1} parent=1 // loop_header_branch
      %15 = sbr.rel (%p13) target = $region8
    $region5: #{mlp_forward.1} parent=1 // loop_body
      %s17 = ssub.s32 %s12, 1
      %s18 = ssub.s32 %s12, 2
      %s25 = sadd.s32 1, %s20
      %p26 = scmp.ge.s32.totalorder %s25, 1
      %s27 = scalar_select %p26, 0, %s25
      %s28 = sadd.s32 1, %s19
      %s29 = scalar_select %p26, %s28, %s19
      %p30 = scmp.ge.s32.totalorder %s29, 2
      %s31 = scalar_select %p30, 0, %s29
      %s32 = ssub.s32 %s19, %s31
      %s33 = ssub.s32 %s20, %s27
      %s34 = sor.u32 %s32, %s33
      %p35 = scmp.eq.s32.totalorder %s34, 0
      %s37 = sadd.s32 %s36, 1
      %s38 = scalar_select %p35, %s36, %s37
      %p41 = pneg %p35
      %p42 = scmp.eq.s32.totalorder %s12, 1
      %p43 = por %p41, %p42
      %p44 = scmp.ne.s32.totalorder %s36, %s39
      %p45 = scmp.eq.s32.totalorder %s12, 0
      %p46 = por %p44, %p45
      %p47 = scmp.ne.s32.totalorder %s36, %s39
      %p48 = scmp.eq.s32.totalorder %s17, 1
      %p49 = por %p47, %p48
      %p50 = scmp.ne.s32.totalorder %s39, %s40
      %p51 = scmp.eq.s32.totalorder %s17, 0
      %p52 = por %p50, %p51
      %p53 = scmp.ne.s32.totalorder %s39, %s40
      %p54 = scmp.eq.s32.totalorder %s18, 1
      %p55 = por %p53, %p54
      %p57 = scmp.ne.s32.totalorder %s40, %s56
      %p58 = scmp.eq.s32.totalorder %s18, 0
      %p59 = por %p57, %p58
      %s61 = sadd.s32 %s60, 1
      %p64 = scmp.eq.s32.totalorder %s12, 1
      %p65 = scmp.ne.s32.totalorder %s60, %s62
      %p66 = scmp.eq.s32.totalorder %s12, 0
      %p67 = por %p65, %p66
      %p68 = scmp.ne.s32.totalorder %s60, %s62
      %p69 = scmp.eq.s32.totalorder %s17, 1
      %p70 = por %p68, %p69
      %p71 = scmp.ne.s32.totalorder %s62, %s63
      %p72 = scmp.eq.s32.totalorder %s17, 0
      %p73 = por %p71, %p72
      %p74 = scmp.ne.s32.totalorder %s62, %s63
      %p75 = scmp.eq.s32.totalorder %s18, 1
      %p76 = por %p74, %p75
      %p78 = scmp.ne.s32.totalorder %s63, %s77
      %p79 = scmp.eq.s32.totalorder %s18, 0
      %p80 = por %p78, %p79
      %s82 = sadd.s32 %s81, 1
      %p85 = scmp.eq.s32.totalorder %s12, 1
      %p86 = scmp.ne.s32.totalorder %s81, %s83
      %p87 = scmp.eq.s32.totalorder %s12, 0
      %p88 = por %p86, %p87
      %p89 = scmp.ne.s32.totalorder %s81, %s83
      %p90 = scmp.eq.s32.totalorder %s17, 1
      %p91 = por %p89, %p90
      %p92 = scmp.ne.s32.totalorder %s83, %s84
      %p93 = scmp.eq.s32.totalorder %s17, 0
      %p94 = por %p92, %p93
      %p95 = scmp.ne.s32.totalorder %s83, %s84
      %p96 = scmp.eq.s32.totalorder %s18, 1
      %p97 = por %p95, %p96
      %p99 = scmp.ne.s32.totalorder %s84, %s98
      %p100 = scmp.eq.s32.totalorder %s18, 0
      %p101 = por %p99, %p100
      %s102 = ssub.s32 %s19, %s31
      %s103 = ssub.s32 %s20, %s27
      %s104 = sor.u32 %s102, %s103
      %p105 = scmp.eq.s32.totalorder %s104, 0
      %s107 = sadd.s32 %s106, 1
      %s108 = scalar_select %p105, %s106, %s107
      %p111 = pneg %p105
      %p112 = scmp.eq.s32.totalorder %s12, 1
      %p113 = por %p111, %p112
      %p114 = scmp.ne.s32.totalorder %s106, %s109
      %p115 = scmp.eq.s32.totalorder %s12, 0
      %p116 = por %p114, %p115
      %p117 = scmp.ne.s32.totalorder %s106, %s109
      %p118 = scmp.eq.s32.totalorder %s17, 1
      %p119 = por %p117, %p118
      %p120 = scmp.ne.s32.totalorder %s109, %s110
      %p121 = scmp.eq.s32.totalorder %s17, 0
      %p122 = por %p120, %p121
      %p123 = scmp.ne.s32.totalorder %s109, %s110
      %p124 = scmp.eq.s32.totalorder %s18, 1
      %p125 = por %p123, %p124
      %p127 = scmp.ne.s32.totalorder %s110, %s126
      %p128 = scmp.eq.s32.totalorder %s18, 0
      %p129 = por %p127, %p128
      %p130 = scmp.le.s32.totalorder 1, %s12
      %p131 = scmp.lt.s32.totalorder %s12, 3
      %p132 = pnand %p130, %p131
      %p133 = pneg %p132
      // Predicated region
      $region9: #{mlp_forward.1} parent=5 // pred_check
        _
      $region10: #{mlp_forward.1} parent=5 // pred_check_branch
        %135 = sbr.rel (%p132) target = $region12
      $region11: #{mlp_forward.1} parent=5 // pred_region
        %s136 = ssub.s32 %s12, 1
        // Predicated region
        $region13: #{mlp_forward.1} parent=11 // pred_check
          %p137 = pneg %p73
        $region14: #{mlp_forward.1} parent=11 // pred_check_branch
          %139 = sbr.rel (%p137) target = $region16
        $region15: #{mlp_forward.1} parent=11 // pred_region
          _
        $region16: #{mlp_forward.1} parent=11 // pred_fallthru
          _
        // Predicated region
        $region17: #{mlp_forward.1} parent=11 // pred_check
          %p140 = pneg %p94
        $region18: #{mlp_forward.1} parent=11 // pred_check_branch
          %142 = sbr.rel (%p140) target = $region20
        $region19: #{mlp_forward.1} parent=11 // pred_region
          _
        $region20: #{mlp_forward.1} parent=11 // pred_fallthru
          _
      $region12: #{mlp_forward.1} parent=5 // pred_fallthru
        _
      %p143 = scmp.lt.s32.totalorder %s12, 2
      // Predicated region
      $region21: #{mlp_forward.1} parent=5 // pred_check
        %p144 = pneg %p143
      $region22: #{mlp_forward.1} parent=5 // pred_check_branch
        %146 = sbr.rel (%p144) target = $region24
      $region23: #{mlp_forward.1} parent=5 // pred_region
        // Predicated region
        $region25: #{mlp_forward.1} parent=23 // pred_check
          %p147 = pneg %p46
        $region26: #{mlp_forward.1} parent=23 // pred_check_branch
          %149 = sbr.rel (%p147) target = $region28
        $region27: #{mlp_forward.1} parent=23 // pred_region
          %s150 = smul.u32 2, %s20
          %p151 = scmp.lt.s32.totalorder %s19, 1
          %s152 = scalar_select %p151, %s19, 1
          %p153 = scmp.lt.s32.totalorder %s150, 1
          %s154 = scalar_select %p153, %s150, 1
          %s155 = smul.addr %s152, 8
          %s156 = sadd.s32 %s154, %s155
          %s157 = smul.addr %s156, 8
          %s158 = scalar_lea.vmem %s0, %s157
          %s159 = smul.u32 2, %s20
        $region28: #{mlp_forward.1} parent=23 // pred_fallthru
          _
      $region24: #{mlp_forward.1} parent=5 // pred_fallthru
        _
      %p160 = scmp.le.s32.totalorder 1, %s12
      %p161 = scmp.lt.s32.totalorder %s12, 3
      %p162 = pnand %p160, %p161
      %p163 = pneg %p162
      // Predicated region
      $region29: #{mlp_forward.1} parent=5 // pred_check
        _
      $region30: #{mlp_forward.1} parent=5 // pred_check_branch
        %165 = sbr.rel (%p162) target = $region32
      $region31: #{mlp_forward.1} parent=5 // pred_region
        %s166 = ssub.s32 %s12, 1
        %s167 = smul.u32 2, %s22
        %p168 = scmp.lt.s32.totalorder %s21, 1
        %s169 = scalar_select %p168, %s21, 1
        %p170 = scmp.lt.s32.totalorder %s167, 1
        %s171 = scalar_select %p170, %s167, 1
        %s172 = smul.addr %s169, 8
        %s173 = sadd.s32 %s171, %s172
        %s174 = smul.addr %s173, 8
        %s175 = scalar_lea.vmem %s0, %s174
        %p176 = pneg %p52
        %p177 = pneg %p49
        %p178 = pneg %p73
        %p179 = pneg %p70
        %p180 = pneg %p94
        %p181 = pneg %p91
        %p182 = pneg %p122
        %p183 = pneg %p119
        %s184 = sand.u32 %s109, 1
        %s185 = scalar_lea.sflag [#allocation3], %s184
        %s186 = sand.u32 %s109, 1
        %s187 = smul.addr %s186, 256
        %s188 = scalar_lea.vmem [#allocation2], %s187
        %s189 = smul.u32 2, %s22
        %p190 = scmp.lt.s32.totalorder %s21, 1
        %s191 = scalar_select %p190, %s21, 1
        %p192 = scmp.lt.s32.totalorder %s189, 1
        %s193 = scalar_select %p192, %s189, 1
        %s194 = smul.addr %s191, 8
        %s195 = sadd.s32 %s193, %s194
        %s196 = smul.addr %s195, 8
        %s197 = scalar_lea.vmem %s0, %s196
        %s198 = smul.u32 2, %s22
        %s199 = smul.u32 32, %s22
        %v200 = vld [vmem:[%s197] sm:$0xff]
        %v201 = vld [vmem:[%s197 + $0x8] sm:$0xff]
        %v202 = vld [vmem:[%s197 + $0x10] sm:$0xff]
        %v203 = vld [vmem:[%s197 + $0x18] sm:$0xff]
        %v204 = vld [vmem:[%s197 + $0x20] sm:$0xff]
        %v205 = vld [vmem:[%s197 + $0x28] sm:$0xff]
        %v206 = vld [vmem:[%s197 + $0x30] sm:$0xff]
        %v207 = vld [vmem:[%s197 + $0x38] sm:$0xff]
        %v208 = vld [vmem:[%s1] sm:$0xff]
        %v209 = vld [vmem:[%s1 + $0x8] sm:$0xff]
        %v210 = vld [vmem:[%s1 + $0x10] sm:$0xff]
        %v211 = vld [vmem:[%s1 + $0x18] sm:$0xff]
        %v212 = vld [vmem:[%s2] sm:$0x1]
        %v214 = vlaneseq
        %v215 = vshrl.u32 %v214, 7
        %v216 = vsub.s32 0, %v215
        %v217 = vrot.slane %v212, %v216
        %219 = vxpose.xlu0.b32.start [1/16] %v200, 128
        %220 = vxpose.xlu0.b32.cont [2/16] %v202, 128
        %221 = vxpose.xlu0.b32.cont [3/16] %v204, 128
        %222 = vxpose.xlu0.b32.cont [4/16] %v206, 128
        %223 = vxpose.xlu0.b32.cont [5/16] 0.0, 128
        %224 = vxpose.xlu0.b32.cont [6/16] 0.0, 128
        %225 = vxpose.xlu0.b32.cont [7/16] 0.0, 128
        %226 = vxpose.xlu0.b32.cont [8/16] 0.0, 128
        %227 = vxpose.xlu0.b32.cont [9/16] 0.0, 128
        %228 = vxpose.xlu0.b32.cont [10/16] 0.0, 128
        %229 = vxpose.xlu0.b32.cont [11/16] 0.0, 128
        %230 = vxpose.xlu0.b32.cont [12/16] 0.0, 128
        %231 = vxpose.xlu0.b32.cont [13/16] 0.0, 128
        %232 = vxpose.xlu0.b32.cont [14/16] 0.0, 128
        %233 = vxpose.xlu0.b32.cont [15/16] 0.0, 128
        %234 = vxpose.xlu0.b32.end [16/16] 0.0, 128
        %v235 = vpop.trf.xlu0
        %v236 = vpop.trf.xlu0
        %v237 = vpop.trf.xlu0
        %v238 = vpop.trf.xlu0
        %v239 = vpop.trf.xlu0
        %v240 = vpop.trf.xlu0
        %v241 = vpop.trf.xlu0
        %v242 = vpop.trf.xlu0
        %v243 = vpop.trf.xlu0
        %v244 = vpop.trf.xlu0
        %v245 = vpop.trf.xlu0
        %v246 = vpop.trf.xlu0
        %v247 = vpop.trf.xlu0
        %v248 = vpop.trf.xlu0
        %v249 = vpop.trf.xlu0
        %v250 = vpop.trf.xlu0
        %251 = vxpose.xlu0.b32.start [1/16] %v201, 128
        %252 = vxpose.xlu0.b32.cont [2/16] %v203, 128
        %253 = vxpose.xlu0.b32.cont [3/16] %v205, 128
        %254 = vxpose.xlu0.b32.cont [4/16] %v207, 128
        %255 = vxpose.xlu0.b32.cont [5/16] 0.0, 128
        %256 = vxpose.xlu0.b32.cont [6/16] 0.0, 128
        %257 = vxpose.xlu0.b32.cont [7/16] 0.0, 128
        %258 = vxpose.xlu0.b32.cont [8/16] 0.0, 128
        %259 = vxpose.xlu0.b32.cont [9/16] 0.0, 128
        %260 = vxpose.xlu0.b32.cont [10/16] 0.0, 128
        %261 = vxpose.xlu0.b32.cont [11/16] 0.0, 128
        %262 = vxpose.xlu0.b32.cont [12/16] 0.0, 128
        %263 = vxpose.xlu0.b32.cont [13/16] 0.0, 128
        %264 = vxpose.xlu0.b32.cont [14/16] 0.0, 128
        %265 = vxpose.xlu0.b32.cont [15/16] 0.0, 128
        %266 = vxpose.xlu0.b32.end [16/16] 0.0, 128
        %v267 = vpop.trf.xlu0
        %v268 = vpop.trf.xlu0
        %v269 = vpop.trf.xlu0
        %v270 = vpop.trf.xlu0
        %v271 = vpop.trf.xlu0
        %v272 = vpop.trf.xlu0
        %v273 = vpop.trf.xlu0
        %v274 = vpop.trf.xlu0
        %v275 = vpop.trf.xlu0
        %v276 = vpop.trf.xlu0
        %v277 = vpop.trf.xlu0
        %v278 = vpop.trf.xlu0
        %v279 = vpop.trf.xlu0
        %v280 = vpop.trf.xlu0
        %v281 = vpop.trf.xlu0
        %v282 = vpop.trf.xlu0
        %vm283 = vcmask 261120
        %v285 = vsel %vm283, %v235, 0
        %v288 = vsel %vm283, %v236, 0
        %v291 = vsel %vm283, %v237, 0
        %v294 = vsel %vm283, %v238, 0
        %v297 = vsel %vm283, %v239, 0
        %v300 = vsel %vm283, %v240, 0
        %v303 = vsel %vm283, %v241, 0
        %v306 = vsel %vm283, %v242, 0
        %v309 = vsel %vm283, %v243, 0
        %v312 = vsel %vm283, %v244, 0
        %v315 = vsel %vm283, %v245, 0
        %v318 = vsel %vm283, %v246, 0
        %v321 = vsel %vm283, %v247, 0
        %v324 = vsel %vm283, %v248, 0
        %v327 = vsel %vm283, %v249, 0
        %v330 = vsel %vm283, %v250, 0
        %v333 = vsel %vm283, %v267, 0
        %v336 = vsel %vm283, %v268, 0
        %v339 = vsel %vm283, %v269, 0
        %v342 = vsel %vm283, %v270, 0
        %v345 = vsel %vm283, %v271, 0
        %v348 = vsel %vm283, %v272, 0
        %v351 = vsel %vm283, %v273, 0
        %v354 = vsel %vm283, %v274, 0
        %v357 = vsel %vm283, %v275, 0
        %v360 = vsel %vm283, %v276, 0
        %v363 = vsel %vm283, %v277, 0
        %v366 = vsel %vm283, %v278, 0
        %v369 = vsel %vm283, %v279, 0
        %v372 = vsel %vm283, %v280, 0
        %v375 = vsel %vm283, %v281, 0
        %v378 = vsel %vm283, %v282, 0
        %380 = vmatprep.subr.mxu0 0.0
        %381 = vmatpush1.msra.mxu0 %v208
        %382 = vmatprep.subr.mxu0 0.0
        %383 = vmatpush1.msra.mxu0 %v209
        %384 = vmatprep.subr.mxu0 0.0
        %385 = vmatpush1.msra.mxu0 %v210
        %386 = vmatprep.subr.mxu0 0.0
        %387 = vmatpush1.msra.mxu0 %v211
        %388 = vmatprep.subr.mxu0 0.0
        %389 = vmatpush1.msra.mxu0 0.0
        %390 = vmatprep.subr.mxu0 0.0
        %391 = vmatpush1.msra.mxu0 0.0
        %392 = vmatprep.subr.mxu0 0.0
        %393 = vmatpush1.msra.mxu0 0.0
        %394 = vmatprep.subr.mxu0 0.0
        %395 = vmatpush1.msra.mxu0 0.0
        %396 = vmatprep.subr.mxu0 0.0
        %397 = vmatpush1.msra.mxu0 0.0
        %398 = vmatprep.subr.mxu0 0.0
        %399 = vmatpush1.msra.mxu0 0.0
        %400 = vmatprep.subr.mxu0 0.0
        %401 = vmatpush1.msra.mxu0 0.0
        %402 = vmatprep.subr.mxu0 0.0
        %403 = vmatpush1.msra.mxu0 0.0
        %404 = vmatprep.subr.mxu0 0.0
        %405 = vmatpush1.msra.mxu0 0.0
        %406 = vmatprep.subr.mxu0 0.0
        %407 = vmatpush1.msra.mxu0 0.0
        %408 = vmatprep.subr.mxu0 0.0
        %409 = vmatpush1.msra.mxu0 0.0
        %410 = vmatprep.subr.mxu0 0.0
        %411 = vmatpush1.msra.mxu0 0.0
        %412 = vmatprep.subr.mxu0 0.0
        %413 = vmatpush1.msra.mxu0 0.0
        %414 = vmatprep.subr.mxu0 0.0
        %415 = vmatpush1.msra.mxu0 0.0
        %416 = vmatprep.subr.mxu0 0.0
        %417 = vmatpush1.msra.mxu0 0.0
        %418 = vmatprep.subr.mxu0 0.0
        %419 = vmatpush1.msra.mxu0 0.0
        %420 = vmatprep.subr.mxu0 0.0
        %421 = vmatpush1.msra.mxu0 0.0
        %422 = vmatprep.subr.mxu0 0.0
        %423 = vmatpush1.msra.mxu0 0.0
        %424 = vmatprep.subr.mxu0 0.0
        %425 = vmatpush1.msra.mxu0 0.0
        %426 = vmatprep.subr.mxu0 0.0
        %427 = vmatpush1.msra.mxu0 0.0
        %428 = vmatprep.subr.mxu0 0.0
        %429 = vmatpush1.msra.mxu0 0.0
        %430 = vmatprep.subr.mxu0 0.0
        %431 = vmatpush1.msra.mxu0 0.0
        %432 = vmatprep.subr.mxu0 0.0
        %433 = vmatpush1.msra.mxu0 0.0
        %434 = vmatprep.subr.mxu0 0.0
        %435 = vmatpush1.msra.mxu0 0.0
        %436 = vmatprep.subr.mxu0 0.0
        %437 = vmatpush1.msra.mxu0 0.0
        %438 = vmatprep.subr.mxu0 0.0
        %439 = vmatpush1.msra.mxu0 0.0
        %440 = vmatprep.subr.mxu0 0.0
        %441 = vmatpush1.msra.mxu0 0.0
        %442 = vmatprep.subr.mxu0 0.0
        %443 = vmatpush1.msra.mxu0 0.0
        %444 = vmatprep.mubr.f32.mxu0 0.0
        %445 = vmatmul.mubr.f32.gmra.mrb[0].mxu0 %v285
        %v446 = vpop.f32.mrb[0].mxu0
        %v447 = vadd.f32 %v217, %v446
        %v448 = vpop.f32.mrb[0].mxu0
        %449 = vmatprep.mubr.f32.mxu0 0.0
        %450 = vmatmul.mubr.f32.gmra.mrb[0].mxu0 %v288
        %v451 = vpop.f32.mrb[0].mxu0
        %v452 = vadd.f32 %v217, %v451
        %v453 = vpop.f32.mrb[0].mxu0
        %454 = vmatprep.mubr.f32.mxu0 0.0
        %455 = vmatmul.mubr.f32.gmra.mrb[0].mxu0 %v291
        %v456 = vpop.f32.mrb[0].mxu0
        %v457 = vadd.f32 %v217, %v456
        %v458 = vpop.f32.mrb[0].mxu0
        %459 = vmatprep.mubr.f32.mxu0 0.0
        %460 = vmatmul.mubr.f32.gmra.mrb[0].mxu0 %v294
        %v461 = vpop.f32.mrb[0].mxu0
        %v462 = vadd.f32 %v217, %v461
        %v463 = vpop.f32.mrb[0].mxu0
        %464 = vmatprep.mubr.f32.mxu0 0.0
        %465 = vmatmul.mubr.f32.gmra.mrb[0].mxu0 %v297
        %v466 = vpop.f32.mrb[0].mxu0
        %v467 = vadd.f32 %v217, %v466
        %v468 = vpop.f32.mrb[0].mxu0
        %469 = vmatprep.mubr.f32.mxu0 0.0
        %470 = vmatmul.mubr.f32.gmra.mrb[0].mxu0 %v300
        %v471 = vpop.f32.mrb[0].mxu0
        %v472 = vadd.f32 %v217, %v471
        %v473 = vpop.f32.mrb[0].mxu0
        %474 = vmatprep.mubr.f32.mxu0 0.0
        %475 = vmatmul.mubr.f32.gmra.mrb[0].mxu0 %v303
        %v476 = vpop.f32.mrb[0].mxu0
        %v477 = vadd.f32 %v217, %v476
        %v478 = vpop.f32.mrb[0].mxu0
        %479 = vmatprep.mubr.f32.mxu0 0.0
        %480 = vmatmul.mubr.f32.gmra.mrb[0].mxu0 %v306
        %v481 = vpop.f32.mrb[0].mxu0
        %v482 = vadd.f32 %v217, %v481
        %v483 = vpop.f32.mrb[0].mxu0
        %484 = vmatprep.mubr.f32.mxu0 0.0
        %485 = vmatmul.mubr.f32.gmra.mrb[0].mxu0 %v309
        %v486 = vpop.f32.mrb[0].mxu0
        %v487 = vadd.f32 %v217, %v486
        %v488 = vpop.f32.mrb[0].mxu0
        %489 = vmatprep.mubr.f32.mxu0 0.0
        %490 = vmatmul.mubr.f32.gmra.mrb[0].mxu0 %v312
        %v491 = vpop.f32.mrb[0].mxu0
        %v492 = vadd.f32 %v217, %v491
        %v493 = vpop.f32.mrb[0].mxu0
        %494 = vmatprep.mubr.f32.mxu0 0.0
        %495 = vmatmul.mubr.f32.gmra.mrb[0].mxu0 %v315
        %v496 = vpop.f32.mrb[0].mxu0
        %v497 = vadd.f32 %v217, %v496
        %v498 = vpop.f32.mrb[0].mxu0
        %499 = vmatprep.mubr.f32.mxu0 0.0
        %500 = vmatmul.mubr.f32.gmra.mrb[0].mxu0 %v318
        %v501 = vpop.f32.mrb[0].mxu0
        %v502 = vadd.f32 %v217, %v501
        %v503 = vpop.f32.mrb[0].mxu0
        %504 = vmatprep.mubr.f32.mxu0 0.0
        %505 = vmatmul.mubr.f32.gmra.mrb[0].mxu0 %v321
        %v506 = vpop.f32.mrb[0].mxu0
        %v507 = vadd.f32 %v217, %v506
        %v508 = vpop.f32.mrb[0].mxu0
        %509 = vmatprep.mubr.f32.mxu0 0.0
        %510 = vmatmul.mubr.f32.gmra.mrb[0].mxu0 %v324
        %v511 = vpop.f32.mrb[0].mxu0
        %v512 = vadd.f32 %v217, %v511
        %v513 = vpop.f32.mrb[0].mxu0
        %514 = vmatprep.mubr.f32.mxu0 0.0
        %515 = vmatmul.mubr.f32.gmra.mrb[0].mxu0 %v327
        %v516 = vpop.f32.mrb[0].mxu0
        %v517 = vadd.f32 %v217, %v516
        %v518 = vpop.f32.mrb[0].mxu0
        %519 = vmatprep.mubr.f32.mxu0 0.0
        %520 = vmatmul.mubr.f32.gmra.mrb[0].mxu0 %v330
        %v521 = vpop.f32.mrb[0].mxu0
        %v522 = vadd.f32 %v217, %v521
        %v523 = vpop.f32.mrb[0].mxu0
        %524 = vmatprep.mubr.f32.mxu0 0.0
        %525 = vmatmul.mubr.f32.gmra.mrb[0].mxu0 %v333
        %v526 = vpop.f32.mrb[0].mxu0
        %v527 = vadd.f32 %v217, %v526
        %v528 = vpop.f32.mrb[0].mxu0
        %529 = vmatprep.mubr.f32.mxu0 0.0
        %530 = vmatmul.mubr.f32.gmra.mrb[0].mxu0 %v336
        %v531 = vpop.f32.mrb[0].mxu0
        %v532 = vadd.f32 %v217, %v531
        %v533 = vpop.f32.mrb[0].mxu0
        %534 = vmatprep.mubr.f32.mxu0 0.0
        %535 = vmatmul.mubr.f32.gmra.mrb[0].mxu0 %v339
        %v536 = vpop.f32.mrb[0].mxu0
        %v537 = vadd.f32 %v217, %v536
        %v538 = vpop.f32.mrb[0].mxu0
        %539 = vmatprep.mubr.f32.mxu0 0.0
        %540 = vmatmul.mubr.f32.gmra.mrb[0].mxu0 %v342
        %v541 = vpop.f32.mrb[0].mxu0
        %v542 = vadd.f32 %v217, %v541
        %v543 = vpop.f32.mrb[0].mxu0
        %544 = vmatprep.mubr.f32.mxu0 0.0
        %545 = vmatmul.mubr.f32.gmra.mrb[0].mxu0 %v345
        %v546 = vpop.f32.mrb[0].mxu0
        %v547 = vadd.f32 %v217, %v546
        %v548 = vpop.f32.mrb[0].mxu0
        %549 = vmatprep.mubr.f32.mxu0 0.0
        %550 = vmatmul.mubr.f32.gmra.mrb[0].mxu0 %v348
        %v551 = vpop.f32.mrb[0].mxu0
        %v552 = vadd.f32 %v217, %v551
        %v553 = vpop.f32.mrb[0].mxu0
        %554 = vmatprep.mubr.f32.mxu0 0.0
        %555 = vmatmul.mubr.f32.gmra.mrb[0].mxu0 %v351
        %v556 = vpop.f32.mrb[0].mxu0
        %v557 = vadd.f32 %v217, %v556
        %v558 = vpop.f32.mrb[0].mxu0
        %559 = vmatprep.mubr.f32.mxu0 0.0
        %560 = vmatmul.mubr.f32.gmra.mrb[0].mxu0 %v354
        %v561 = vpop.f32.mrb[0].mxu0
        %v562 = vadd.f32 %v217, %v561
        %v563 = vpop.f32.mrb[0].mxu0
        %564 = vmatprep.mubr.f32.mxu0 0.0
        %565 = vmatmul.mubr.f32.gmra.mrb[0].mxu0 %v357
        %v566 = vpop.f32.mrb[0].mxu0
        %v567 = vadd.f32 %v217, %v566
        %v568 = vpop.f32.mrb[0].mxu0
        %569 = vmatprep.mubr.f32.mxu0 0.0
        %570 = vmatmul.mubr.f32.gmra.mrb[0].mxu0 %v360
        %v571 = vpop.f32.mrb[0].mxu0
        %v572 = vadd.f32 %v217, %v571
        %v573 = vpop.f32.mrb[0].mxu0
        %574 = vmatprep.mubr.f32.mxu0 0.0
        %575 = vmatmul.mubr.f32.gmra.mrb[0].mxu0 %v363
        %v576 = vpop.f32.mrb[0].mxu0
        %v577 = vadd.f32 %v217, %v576
        %v578 = vpop.f32.mrb[0].mxu0
        %579 = vmatprep.mubr.f32.mxu0 0.0
        %580 = vmatmul.mubr.f32.gmra.mrb[0].mxu0 %v366
        %v581 = vpop.f32.mrb[0].mxu0
        %v582 = vadd.f32 %v217, %v581
        %v583 = vpop.f32.mrb[0].mxu0
        %584 = vmatprep.mubr.f32.mxu0 0.0
        %585 = vmatmul.mubr.f32.gmra.mrb[0].mxu0 %v369
        %v586 = vpop.f32.mrb[0].mxu0
        %v587 = vadd.f32 %v217, %v586
        %v588 = vpop.f32.mrb[0].mxu0
        %589 = vmatprep.mubr.f32.mxu0 0.0
        %590 = vmatmul.mubr.f32.gmra.mrb[0].mxu0 %v372
        %v591 = vpop.f32.mrb[0].mxu0
        %v592 = vadd.f32 %v217, %v591
        %v593 = vpop.f32.mrb[0].mxu0
        %594 = vmatprep.mubr.f32.mxu0 0.0
        %595 = vmatmul.mubr.f32.gmra.mrb[0].mxu0 %v375
        %v596 = vpop.f32.mrb[0].mxu0
        %v597 = vadd.f32 %v217, %v596
        %v598 = vpop.f32.mrb[0].mxu0
        %599 = vmatprep.mubr.f32.mxu0 0.0
        %600 = vmatmul.mubr.f32.gmra.mrb[0].mxu0 %v378
        %v601 = vpop.f32.mrb[0].mxu0
        %v602 = vadd.f32 %v217, %v601
        %v603 = vpop.f32.mrb[0].mxu0
        %604 = vdwg.mxu0
        %605 = vst [vmem:[%s188] sm:$0xff] %v447
        %606 = vst [vmem:[%s188 + $0x8] sm:$0xff] %v452
        %607 = vst [vmem:[%s188 + $0x10] sm:$0xff] %v457
        %608 = vst [vmem:[%s188 + $0x18] sm:$0xff] %v462
        %609 = vst [vmem:[%s188 + $0x20] sm:$0xff] %v467
        %610 = vst [vmem:[%s188 + $0x28] sm:$0xff] %v472
        %611 = vst [vmem:[%s188 + $0x30] sm:$0xff] %v477
        %612 = vst [vmem:[%s188 + $0x38] sm:$0xff] %v482
        %613 = vst [vmem:[%s188 + $0x40] sm:$0xff] %v487
        %614 = vst [vmem:[%s188 + $0x48] sm:$0xff] %v492
        %615 = vst [vmem:[%s188 + $0x50] sm:$0xff] %v497
        %616 = vst [vmem:[%s188 + $0x58] sm:$0xff] %v502
        %617 = vst [vmem:[%s188 + $0x60] sm:$0xff] %v507
        %618 = vst [vmem:[%s188 + $0x68] sm:$0xff] %v512
        %619 = vst [vmem:[%s188 + $0x70] sm:$0xff] %v517
        %620 = vst [vmem:[%s188 + $0x78] sm:$0xff] %v522
        %621 = vst [vmem:[%s188 + $0x80] sm:$0xff] %v527
        %622 = vst [vmem:[%s188 + $0x88] sm:$0xff] %v532
        %623 = vst [vmem:[%s188 + $0x90] sm:$0xff] %v537
        %624 = vst [vmem:[%s188 + $0x98] sm:$0xff] %v542
        %625 = vst [vmem:[%s188 + $0xa0] sm:$0xff] %v547
        %626 = vst [vmem:[%s188 + $0xa8] sm:$0xff] %v552
        %627 = vst [vmem:[%s188 + $0xb0] sm:$0xff] %v557
        %628 = vst [vmem:[%s188 + $0xb8] sm:$0xff] %v562
        %629 = vst [vmem:[%s188 + $0xc0] sm:$0xff] %v567
        %630 = vst [vmem:[%s188 + $0xc8] sm:$0xff] %v572
        %631 = vst [vmem:[%s188 + $0xd0] sm:$0xff] %v577
        %632 = vst [vmem:[%s188 + $0xd8] sm:$0xff] %v582
        %633 = vst [vmem:[%s188 + $0xe0] sm:$0xff] %v587
        %634 = vst [vmem:[%s188 + $0xe8] sm:$0xff] %v592
        %635 = vst [vmem:[%s188 + $0xf0] sm:$0xff] %v597
        %636 = vst [vmem:[%s188 + $0xf8] sm:$0xff] %v602
        %s637 = sand.u32 %s109, 1
        %s638 = scalar_lea.sflag [#allocation3], %s637
        %s639 = sand.u32 %s109, 1
        %s640 = smul.addr %s639, 256
        %s641 = scalar_lea.vmem [#allocation2], %s640
        // Predicated region
        $region33: #{mlp_forward.1} parent=31 // pred_check
          %p642 = pneg %p119
        $region34: #{mlp_forward.1} parent=31 // pred_check_branch
          %644 = sbr.rel (%p642) target = $region36
        $region35: #{mlp_forward.1} parent=31 // pred_region
          %s645 = smul.u32 32, %s22
          %s647 = ssub.s32 4096, 4096
          %648 = vsyncadd %s638, %s647
          %s649 = smul.addr %s21, 32
          %s650 = sadd.s32 %s645, %s649
          %s651 = smul.addr %s650, 128
          %s652 = scalar_lea.hbm %s3, %s651
          %s653 = sshll.u32 %s641, 4
          %s654 = int_to_ptr.vmem [resolvable:$true] %s653
          %659 = dma.vmem_to_hbm [thread:$0]  %s654, 4096, %s652, %s638, 128, 128, 8
        $region36: #{mlp_forward.1} parent=31 // pred_fallthru
          _
      $region32: #{mlp_forward.1} parent=5 // pred_fallthru
        _
      %p660 = scmp.le.s32.totalorder 2, %s12
      // Predicated region
      $region37: #{mlp_forward.1} parent=5 // pred_check
        %p661 = pneg %p660
      $region38: #{mlp_forward.1} parent=5 // pred_check_branch
        %663 = sbr.rel (%p661) target = $region40
      $region39: #{mlp_forward.1} parent=5 // pred_region
        %s664 = ssub.s32 %s12, 2
        // Predicated region
        $region41: #{mlp_forward.1} parent=39 // pred_check
          %p665 = pneg %p125
        $region42: #{mlp_forward.1} parent=39 // pred_check_branch
          %667 = sbr.rel (%p665) target = $region44
        $region43: #{mlp_forward.1} parent=39 // pred_region
          %s668 = sand.u32 %s110, 1
          %s669 = scalar_lea.sflag [#allocation3], %s668
          %s670 = sand.u32 %s110, 1
          %s671 = smul.addr %s670, 256
          %s672 = scalar_lea.vmem [#allocation2], %s671
          %673 = dma.done %s669, 4096
        $region44: #{mlp_forward.1} parent=39 // pred_fallthru
          _
      $region40: #{mlp_forward.1} parent=5 // pred_fallthru
        _
    $region6: #{mlp_forward.1} parent=1 // loop_footer
      %s16 = sadd.s32 1, %s12
    $region7: #{mlp_forward.1} parent=1 // loop_footer_branch
      %11 = sbr.rel target = $region3
    $region8: #{mlp_forward.1} parent=1 // loop_exit
      _
    %674 = vsyncpa [#allocation3], 1
    %s675 = scalar_lea.sflag [#allocation3], 1
    %676 = vsyncpa %s675, 1

</llo_original>
